<compile_context>
chip_gen: v7x
topology: tpu7x:2x2x1
jax: 0.10.0
libtpu: 0.0.40
codegen_flags: <defaults>
</compile_context>

<pallas_src>
import jax
import jax.numpy as jnp
from jax.experimental import pallas as pl
from jax.experimental.pallas import tpu as pltpu

_OPAD = 128  # lane-dense padded width for the final (O=2) layer


def mlp_kernel(x_ref, w1_ref, b1_ref, w2_ref, b2_ref, w3_ref, b3_ref, o_ref):
    # All three layers fused in VMEM; MXU matmuls (f32 accumulation) + VPU
    # relu / bias adds. Activations are cast back to the weight dtype (bf16 on
    # the fast path) before the next matmul.
    x = x_ref[...]
    a = jnp.dot(x, w1_ref[...], preferred_element_type=jnp.float32) + b1_ref[...]
    a = jnp.maximum(a, 0.0).astype(w2_ref.dtype)
    b = jnp.dot(a, w2_ref[...], preferred_element_type=jnp.float32) + b2_ref[...]
    b = jnp.maximum(b, 0.0).astype(w3_ref.dtype)
    c = jnp.dot(b, w3_ref[...], preferred_element_type=jnp.float32) + b3_ref[...]
    o_ref[...] = c.astype(o_ref.dtype)


def _pick_batch_tile(B, *, max_tile=2048):
    # Multiples of 256 (v6e/v7x MXU M dim; also a multiple of v5e's 128).
    tile = max(256, min(max_tile, pl.next_power_of_2(max(B, 1))))
    # Keep at least 2 grid steps for larger batches so v7x's two TensorCores
    # both get a share under dimension_semantics=("parallel",).
    if B > 256 and pl.cdiv(B, tile) < 2:
        tile = max(256, tile // 2)
    return tile


def mlp_forward(x, params, *, batch_tile=None, compute_dtype=jnp.bfloat16):
    w1, b1, w2, b2, w3, b3 = params
    B, D = x.shape
    H1 = w1.shape[1]  # 64
    H2 = w2.shape[1]  # 32
    O = w3.shape[1]   # 2

    if batch_tile is None:
        batch_tile = _pick_batch_tile(B)
    B_pad = pl.cdiv(B, batch_tile) * batch_tile
    grid = (B_pad // batch_tile,)

    cd = jnp.dtype(compute_dtype)

    # Operand prep (wrapper-side, cheap): dtype cast, ragged-batch zero pad,
    # lane-pad the final layer to 128 output columns (zeros).
    x_p = x.astype(cd)
    if B_pad != B:
        x_p = jnp.pad(x_p, ((0, B_pad - B), (0, 0)))
    w3_p = jnp.pad(w3, ((0, 0), (0, _OPAD - O)))
    b3_p = jnp.pad(b3, ((0, 0), (0, _OPAD - O)))

    w1c, w2c, w3c = w1.astype(cd), w2.astype(cd), w3_p.astype(cd)
    b1f, b2f, b3f = (b1.astype(jnp.float32), b2.astype(jnp.float32),
                     b3_p.astype(jnp.float32))

    def rep(shape):
        # Constant index_map -> block stays VMEM-resident across batch tiles
        # (weights are ~16 KiB total; no per-step re-DMA).
        return pl.BlockSpec(shape, lambda i: (0, 0))

    out = pl.pallas_call(
        mlp_kernel,
        out_shape=jax.ShapeDtypeStruct((B_pad, _OPAD), jnp.float32),
        grid_spec=pl.GridSpec(
            grid=grid,
            in_specs=[
                pl.BlockSpec((batch_tile, D), lambda i: (i, 0)),
                rep((D, H1)),
                rep((1, H1)),
                rep((H1, H2)),
                rep((1, H2)),
                rep((H2, _OPAD)),
                rep((1, _OPAD)),
            ],
            out_specs=pl.BlockSpec((batch_tile, _OPAD), lambda i: (i, 0)),
        ),
        compiler_params=pltpu.CompilerParams(
            dimension_semantics=("parallel",)),
    )(x_p, w1c, b1f, w2c, b2f, w3c, b3f)

    return out[:B, :O]


def init_params(key, data_dim):
    # Deterministic init mimicking nn.Linear default: U(-1/sqrt(fan_in), ...).
    # Weights stored pre-transposed as (in_features, out_features) so the
    # kernel computes x @ W + b, matching PyTorch's x @ W.T + b.
    dims = [(data_dim, 64), (64, 32), (32, 2)]
    params = []
    keys = jax.random.split(key, 2 * len(dims))
    for li, (fin, fout) in enumerate(dims):
        bound = 1.0 / jnp.sqrt(fin)
        w = jax.random.uniform(keys[2 * li], (fin, fout), jnp.float32, -bound, bound)
        b = jax.random.uniform(keys[2 * li + 1], (1, fout), jnp.float32, -bound, bound)
        params += [w, b]
    return tuple(params)


def mlp_reference(x, params):
    w1, b1, w2, b2, w3, b3 = params
    a = jnp.maximum(x @ w1 + b1, 0.0)
    b = jnp.maximum(a @ w2 + b2, 0.0)
    return b @ w3 + b3


if __name__ == "__main__":
    key = jax.random.PRNGKey(0)
    kx, kx2, kp = jax.random.split(key, 3)

    data_dim = 32
    params = init_params(kp, data_dim)

    # Small batch (original test size): f32 path, tight tolerance.
    batch = 8
    x = jax.random.normal(kx, (batch, data_dim), jnp.float32)
    ref = mlp_reference(x, params)
    out_f32 = jax.block_until_ready(
        mlp_forward(x, params, compute_dtype=jnp.float32))
    assert out_f32.shape == (batch, 2)
    assert jnp.allclose(out_f32, ref, atol=1e-5, rtol=1e-5)

    # Small batch, bf16-operand fast path (f32 accumulation) -> looser tol.
    out_bf16 = jax.block_until_ready(
        mlp_forward(x, params, compute_dtype=jnp.bfloat16))
    assert out_bf16.shape == (batch, 2)
    assert jnp.allclose(out_bf16, ref, atol=5e-2, rtol=5e-2)

    # Larger ragged batch: exercises multi-step grid + row padding/slicing.
    batch2 = 777
    x2 = jax.random.normal(kx2, (batch2, data_dim), jnp.float32)
    ref2 = mlp_reference(x2, params)
    out2 = jax.block_until_ready(
        mlp_forward(x2, params, compute_dtype=jnp.float32))
    assert out2.shape == (batch2, 2)
    assert jnp.allclose(out2, ref2, atol=1e-5, rtol=1e-5)

    print("KERNEL_OK")
</pallas_src>

<mosaic_0001>
module attributes {stable_mosaic.version = 11 : i64} {
  func.func @mlp_kernel(%arg0: i32, %arg1: memref<256x32xf32, #tpu.memory_space<vmem>>, %arg2: memref<32x64xf32, #tpu.memory_space<vmem>>, %arg3: memref<1x64xf32, #tpu.memory_space<vmem>>, %arg4: memref<64x32xf32, #tpu.memory_space<vmem>>, %arg5: memref<1x32xf32, #tpu.memory_space<vmem>>, %arg6: memref<32x128xf32, #tpu.memory_space<vmem>>, %arg7: memref<1x128xf32, #tpu.memory_space<vmem>>, %arg8: memref<256x128xf32, #tpu.memory_space<vmem>>) attributes {dimension_semantics = [#tpu.dimension_semantics<parallel>], iteration_bounds = array<i64: 1>, scalar_prefetch = 0 : i64, scratch_operands = 0 : i64, tpu.core_type = #tpu.core_type<tc>, window_params = [{transform_indices = @transform_0, window_bounds = array<i64: 256, 32>}, {pipeline_mode = #tpu.pipeline_mode<synchronous>, transform_indices = @transform_1, window_bounds = array<i64: 32, 64>}, {pipeline_mode = #tpu.pipeline_mode<synchronous>, transform_indices = @transform_2, window_bounds = array<i64: 1, 64>}, {pipeline_mode = #tpu.pipeline_mode<synchronous>, transform_indices = @transform_3, window_bounds = array<i64: 64, 32>}, {pipeline_mode = #tpu.pipeline_mode<synchronous>, transform_indices = @transform_4, window_bounds = array<i64: 1, 32>}, {pipeline_mode = #tpu.pipeline_mode<synchronous>, transform_indices = @transform_5, window_bounds = array<i64: 32, 128>}, {pipeline_mode = #tpu.pipeline_mode<synchronous>, transform_indices = @transform_6, window_bounds = array<i64: 1, 128>}, {transform_indices = @transform_7, window_bounds = array<i64: 256, 128>}]} {
    %c0 = arith.constant 0 : index
    %c0_0 = arith.constant 0 : index
    %0 = vector.load %arg1[%c0, %c0_0] : memref<256x32xf32, #tpu.memory_space<vmem>>, vector<256x32xf32>
    %c0_1 = arith.constant 0 : index
    %c0_2 = arith.constant 0 : index
    %1 = vector.load %arg2[%c0_1, %c0_2] : memref<32x64xf32, #tpu.memory_space<vmem>>, vector<32x64xf32>
    %cst = arith.constant dense<0.000000e+00> : vector<256x64xf32>
    %2 = tpu.matmul %0, %1, %cst {dimension_numbers = #tpu.dot_dimension_numbers<[1], [0], [0], [1], [0, 0, 1, 1], [], []>} : vector<256x32xf32>, vector<32x64xf32>, vector<256x64xf32> -> vector<256x64xf32>
    %c0_3 = arith.constant 0 : index
    %c0_4 = arith.constant 0 : index
    %3 = vector.load %arg3[%c0_3, %c0_4] : memref<1x64xf32, #tpu.memory_space<vmem>>, vector<1x64xf32>
    %4 = vector.broadcast %3 : vector<1x64xf32> to vector<256x64xf32>
    %5 = arith.addf %2, %4 : vector<256x64xf32>
    %cst_5 = arith.constant 0.000000e+00 : f32
    %6 = vector.broadcast %cst_5 : f32 to vector<256x64xf32>
    %7 = arith.maximumf %5, %6 : vector<256x64xf32>
    %c0_6 = arith.constant 0 : index
    %c0_7 = arith.constant 0 : index
    %8 = vector.load %arg4[%c0_6, %c0_7] : memref<64x32xf32, #tpu.memory_space<vmem>>, vector<64x32xf32>
    %cst_8 = arith.constant dense<0.000000e+00> : vector<256x32xf32>
    %9 = tpu.matmul %7, %8, %cst_8 {dimension_numbers = #tpu.dot_dimension_numbers<[1], [0], [0], [1], [0, 0, 1, 1], [], []>} : vector<256x64xf32>, vector<64x32xf32>, vector<256x32xf32> -> vector<256x32xf32>
    %c0_9 = arith.constant 0 : index
    %c0_10 = arith.constant 0 : index
    %10 = vector.load %arg5[%c0_9, %c0_10] : memref<1x32xf32, #tpu.memory_space<vmem>>, vector<1x32xf32>
    %11 = vector.broadcast %10 : vector<1x32xf32> to vector<256x32xf32>
    %12 = arith.addf %9, %11 : vector<256x32xf32>
    %cst_11 = arith.constant 0.000000e+00 : f32
    %13 = vector.broadcast %cst_11 : f32 to vector<256x32xf32>
    %14 = arith.maximumf %12, %13 : vector<256x32xf32>
    %c0_12 = arith.constant 0 : index
    %c0_13 = arith.constant 0 : index
    %15 = vector.load %arg6[%c0_12, %c0_13] : memref<32x128xf32, #tpu.memory_space<vmem>>, vector<32x128xf32>
    %cst_14 = arith.constant dense<0.000000e+00> : vector<256x128xf32>
    %16 = tpu.matmul %14, %15, %cst_14 {dimension_numbers = #tpu.dot_dimension_numbers<[1], [0], [0], [1], [0, 0, 1, 1], [], []>} : vector<256x32xf32>, vector<32x128xf32>, vector<256x128xf32> -> vector<256x128xf32>
    %c0_15 = arith.constant 0 : index
    %c0_16 = arith.constant 0 : index
    %17 = vector.load %arg7[%c0_15, %c0_16] : memref<1x128xf32, #tpu.memory_space<vmem>>, vector<1x128xf32>
    %18 = vector.broadcast %17 : vector<1x128xf32> to vector<256x128xf32>
    %19 = arith.addf %16, %18 : vector<256x128xf32>
    %c0_17 = arith.constant 0 : index
    %c0_18 = arith.constant 0 : index
    %20 = vector.load %arg8[%c0_17, %c0_18] : memref<256x128xf32, #tpu.memory_space<vmem>>, vector<256x128xf32>
    tpu.vector_store %arg8[%c0_17, %c0_18], %19 {strides = array<i32>} : memref<256x128xf32, #tpu.memory_space<vmem>>, vector<256x128xf32>,
    return
  }
  func.func @transform_0(%arg0: i32) -> (i32, i32) {
    %c0_i32 = arith.constant 0 : i32
    %c0_i32_0 = arith.constant 0 : i32
    return %arg0, %c0_i32 : i32, i32
  }
  func.func @transform_1(%arg0: i32) -> (i32, i32) {
    %c0_i32 = arith.constant 0 : i32
    %c0_i32_0 = arith.constant 0 : i32
    %c0_i32_1 = arith.constant 0 : i32
    return %c0_i32, %c0_i32_0 : i32, i32
  }
  func.func @transform_2(%arg0: i32) -> (i32, i32) {
    %c0_i32 = arith.constant 0 : i32
    %c0_i32_0 = arith.constant 0 : i32
    %c0_i32_1 = arith.constant 0 : i32
    return %c0_i32, %c0_i32_0 : i32, i32
  }
  func.func @transform_3(%arg0: i32) -> (i32, i32) {
    %c0_i32 = arith.constant 0 : i32
    %c0_i32_0 = arith.constant 0 : i32
    %c0_i32_1 = arith.constant 0 : i32
    return %c0_i32, %c0_i32_0 : i32, i32
  }
  func.func @transform_4(%arg0: i32) -> (i32, i32) {
    %c0_i32 = arith.constant 0 : i32
    %c0_i32_0 = arith.constant 0 : i32
    %c0_i32_1 = arith.constant 0 : i32
    return %c0_i32, %c0_i32_0 : i32, i32
  }
  func.func @transform_5(%arg0: i32) -> (i32, i32) {
    %c0_i32 = arith.constant 0 : i32
    %c0_i32_0 = arith.constant 0 : i32
    %c0_i32_1 = arith.constant 0 : i32
    return %c0_i32, %c0_i32_0 : i32, i32
  }
  func.func @transform_6(%arg0: i32) -> (i32, i32) {
    %c0_i32 = arith.constant 0 : i32
    %c0_i32_0 = arith.constant 0 : i32
    %c0_i32_1 = arith.constant 0 : i32
    return %c0_i32, %c0_i32_0 : i32, i32
  }
  func.func @transform_7(%arg0: i32) -> (i32, i32) {
    %c0_i32 = arith.constant 0 : i32
    %c0_i32_0 = arith.constant 0 : i32
    return %arg0, %c0_i32 : i32, i32
  }
}

</mosaic_0001>

<llo_original>
// kernel: tpu_custom_call.1
$region0: #{tpu_custom_call.1}
  #allocation0 [shape = 'u32[]', space=smem, size = 0x4, offset = 0x4, fixed_abs, tag = 'smem constant byte address 0x4 - core index']
  #allocation1 [shape = 'u32[144,128]{1,0:T(1,128)}', space=vmem, size = 0x12000, scoped, tag = 'internal scratch']
  %s0 = inlined_call_operand.vmem [shape: f32[256,32], index: 0, kind: input, shape index: {}]
  %s1 = inlined_call_operand.vmem [shape: f32[32,64], index: 1, kind: input, shape index: {}]
  %s2 = inlined_call_operand.vmem [shape: f32[1,64], index: 2, kind: input, shape index: {}]
  %s3 = inlined_call_operand.vmem [shape: f32[64,32], index: 3, kind: input, shape index: {}]
  %s4 = inlined_call_operand.vmem [shape: f32[1,32], index: 4, kind: input, shape index: {}]
  %s5 = inlined_call_operand.vmem [shape: f32[32,128], index: 5, kind: input, shape index: {}]
  %s6 = inlined_call_operand.vmem [shape: f32[1,128], index: 6, kind: input, shape index: {}]
  %s7 = inlined_call_operand.hbm [shape: f32[256,128], index: 7, kind: output, shape index: {}]
  %s8 = sld [smem:[#allocation0]]
  $region38: #{tpu_custom_call.1} parent=0
    _
  %s10 = ssub.s32 1, %s8
  %s11 = scalar_select 0, %s10, %s8
  $region1: #{tpu_custom_call.1} parent=0
    #allocation2 [shape = 'u8[131072]{0}', space=vmem, size = 0x20000, scoped, tag = 'output window, operand 0, single buffered']
    #allocation3 [shape = 's32[1]{0}', space=sflag, size = 0x4, scoped, tag = 'scoped memory for tpu_custom_call.1']
    %12 = vsyncpa [#allocation3], 0
    // Predicated region
    $region2: #{tpu_custom_call.1} parent=1 // pred_check
      _
    $region3: #{tpu_custom_call.1} parent=1 // pred_check_branch
      %14 = sbr.rel (0) target = $region5
    $region4: #{tpu_custom_call.1} parent=1 // pred_region
      _
    $region5: #{tpu_custom_call.1} parent=1 // pred_fallthru
      _
    // Predicated region
    $region6: #{tpu_custom_call.1} parent=1 // pred_check
      _
    $region7: #{tpu_custom_call.1} parent=1 // pred_check_branch
      %16 = sbr.rel (0) target = $region9
    $region8: #{tpu_custom_call.1} parent=1 // pred_region
      _
    $region9: #{tpu_custom_call.1} parent=1 // pred_fallthru
      _
    // Predicated region
    $region10: #{tpu_custom_call.1} parent=1 // pred_check
      _
    $region11: #{tpu_custom_call.1} parent=1 // pred_check_branch
      %18 = sbr.rel (0) target = $region13
    $region12: #{tpu_custom_call.1} parent=1 // pred_region
      _
    $region13: #{tpu_custom_call.1} parent=1 // pred_fallthru
      _
    // Predicated region
    $region14: #{tpu_custom_call.1} parent=1 // pred_check
      _
    $region15: #{tpu_custom_call.1} parent=1 // pred_check_branch
      %20 = sbr.rel (0) target = $region17
    $region16: #{tpu_custom_call.1} parent=1 // pred_region
      _
    $region17: #{tpu_custom_call.1} parent=1 // pred_fallthru
      _
    // Predicated region
    $region18: #{tpu_custom_call.1} parent=1 // pred_check
      _
    $region19: #{tpu_custom_call.1} parent=1 // pred_check_branch
      %22 = sbr.rel (0) target = $region21
    $region20: #{tpu_custom_call.1} parent=1 // pred_region
      _
    $region21: #{tpu_custom_call.1} parent=1 // pred_fallthru
      _
    // Predicated region
    $region22: #{tpu_custom_call.1} parent=1 // pred_check
      _
    $region23: #{tpu_custom_call.1} parent=1 // pred_check_branch
      %24 = sbr.rel (0) target = $region25
    $region24: #{tpu_custom_call.1} parent=1 // pred_region
      _
    $region25: #{tpu_custom_call.1} parent=1 // pred_fallthru
      _
    // Predicated region
    $region26: #{tpu_custom_call.1} parent=1 // pred_check
      _
    $region27: #{tpu_custom_call.1} parent=1 // pred_check_branch
      %26 = sbr.rel (0) target = $region29
    $region28: #{tpu_custom_call.1} parent=1 // pred_region
      _
    $region29: #{tpu_custom_call.1} parent=1 // pred_fallthru
      _
    %v27 = vld [vmem:[%s0] sm:$0xff]
    %v28 = vld [vmem:[%s0 + $0x8] sm:$0xff]
    %v29 = vld [vmem:[%s0 + $0x10] sm:$0xff]
    %v30 = vld [vmem:[%s0 + $0x18] sm:$0xff]
    %v31 = vld [vmem:[%s0 + $0x20] sm:$0xff]
    %v32 = vld [vmem:[%s0 + $0x28] sm:$0xff]
    %v33 = vld [vmem:[%s0 + $0x30] sm:$0xff]
    %v34 = vld [vmem:[%s0 + $0x38] sm:$0xff]
    %v35 = vld [vmem:[%s0 + $0x40] sm:$0xff]
    %v36 = vld [vmem:[%s0 + $0x48] sm:$0xff]
    %v37 = vld [vmem:[%s0 + $0x50] sm:$0xff]
    %v38 = vld [vmem:[%s0 + $0x58] sm:$0xff]
    %v39 = vld [vmem:[%s0 + $0x60] sm:$0xff]
    %v40 = vld [vmem:[%s0 + $0x68] sm:$0xff]
    %v41 = vld [vmem:[%s0 + $0x70] sm:$0xff]
    %v42 = vld [vmem:[%s0 + $0x78] sm:$0xff]
    %v43 = vld [vmem:[%s0 + $0x80] sm:$0xff]
    %v44 = vld [vmem:[%s0 + $0x88] sm:$0xff]
    %v45 = vld [vmem:[%s0 + $0x90] sm:$0xff]
    %v46 = vld [vmem:[%s0 + $0x98] sm:$0xff]
    %v47 = vld [vmem:[%s0 + $0xa0] sm:$0xff]
    %v48 = vld [vmem:[%s0 + $0xa8] sm:$0xff]
    %v49 = vld [vmem:[%s0 + $0xb0] sm:$0xff]
    %v50 = vld [vmem:[%s0 + $0xb8] sm:$0xff]
    %v51 = vld [vmem:[%s0 + $0xc0] sm:$0xff]
    %v52 = vld [vmem:[%s0 + $0xc8] sm:$0xff]
    %v53 = vld [vmem:[%s0 + $0xd0] sm:$0xff]
    %v54 = vld [vmem:[%s0 + $0xd8] sm:$0xff]
    %v55 = vld [vmem:[%s0 + $0xe0] sm:$0xff]
    %v56 = vld [vmem:[%s0 + $0xe8] sm:$0xff]
    %v57 = vld [vmem:[%s0 + $0xf0] sm:$0xff]
    %v58 = vld [vmem:[%s0 + $0xf8] sm:$0xff]
    %v59 = vld [vmem:[%s1] sm:$0xff]
    %v60 = vld [vmem:[%s1 + $0x8] sm:$0xff]
    %v61 = vld [vmem:[%s1 + $0x10] sm:$0xff]
    %v62 = vld [vmem:[%s1 + $0x18] sm:$0xff]
    %v63 = vld [vmem:[%s2] sm:$0x1]
    %v65 = vlaneseq
    %v66 = vshrl.u32 %v65, 7
    %v67 = vsub.s32 0, %v66
    %v68 = vrot.slane %v63, %v67
    %vm70 = vcmask 261120
    %v72 = vsel %vm70, %v27, 0
    %v75 = vsel %vm70, %v28, 0
    %v78 = vsel %vm70, %v29, 0
    %v81 = vsel %vm70, %v30, 0
    %v84 = vsel %vm70, %v31, 0
    %v87 = vsel %vm70, %v32, 0
    %v90 = vsel %vm70, %v33, 0
    %v93 = vsel %vm70, %v34, 0
    %v96 = vsel %vm70, %v35, 0
    %v99 = vsel %vm70, %v36, 0
    %v102 = vsel %vm70, %v37, 0
    %v105 = vsel %vm70, %v38, 0
    %v108 = vsel %vm70, %v39, 0
    %v111 = vsel %vm70, %v40, 0
    %v114 = vsel %vm70, %v41, 0
    %v117 = vsel %vm70, %v42, 0
    %v120 = vsel %vm70, %v43, 0
    %v123 = vsel %vm70, %v44, 0
    %v126 = vsel %vm70, %v45, 0
    %v129 = vsel %vm70, %v46, 0
    %v132 = vsel %vm70, %v47, 0
    %v135 = vsel %vm70, %v48, 0
    %v138 = vsel %vm70, %v49, 0
    %v141 = vsel %vm70, %v50, 0
    %v144 = vsel %vm70, %v51, 0
    %v147 = vsel %vm70, %v52, 0
    %v150 = vsel %vm70, %v53, 0
    %v153 = vsel %vm70, %v54, 0
    %v156 = vsel %vm70, %v55, 0
    %v159 = vsel %vm70, %v56, 0
    %v162 = vsel %vm70, %v57, 0
    %v165 = vsel %vm70, %v58, 0
    %167 = vmatprep.subr.mxu0 0.0
    %168 = vmatpush1.msra.mxu0 %v59
    %169 = vmatprep.subr.mxu0 0.0
    %170 = vmatpush1.msra.mxu0 %v60
    %171 = vmatprep.subr.mxu0 0.0
    %172 = vmatpush1.msra.mxu0 %v61
    %173 = vmatprep.subr.mxu0 0.0
    %174 = vmatpush1.msra.mxu0 %v62
    %175 = vmatprep.subr.mxu0 0.0
    %176 = vmatpush1.msra.mxu0 0.0
    %177 = vmatprep.subr.mxu0 0.0
    %178 = vmatpush1.msra.mxu0 0.0
    %179 = vmatprep.subr.mxu0 0.0
    %180 = vmatpush1.msra.mxu0 0.0
    %181 = vmatprep.subr.mxu0 0.0
    %182 = vmatpush1.msra.mxu0 0.0
    %183 = vmatprep.subr.mxu0 0.0
    %184 = vmatpush1.msra.mxu0 0.0
    %185 = vmatprep.subr.mxu0 0.0
    %186 = vmatpush1.msra.mxu0 0.0
    %187 = vmatprep.subr.mxu0 0.0
    %188 = vmatpush1.msra.mxu0 0.0
    %189 = vmatprep.subr.mxu0 0.0
    %190 = vmatpush1.msra.mxu0 0.0
    %191 = vmatprep.subr.mxu0 0.0
    %192 = vmatpush1.msra.mxu0 0.0
    %193 = vmatprep.subr.mxu0 0.0
    %194 = vmatpush1.msra.mxu0 0.0
    %195 = vmatprep.subr.mxu0 0.0
    %196 = vmatpush1.msra.mxu0 0.0
    %197 = vmatprep.subr.mxu0 0.0
    %198 = vmatpush1.msra.mxu0 0.0
    %199 = vmatprep.subr.mxu0 0.0
    %200 = vmatpush1.msra.mxu0 0.0
    %201 = vmatprep.subr.mxu0 0.0
    %202 = vmatpush1.msra.mxu0 0.0
    %203 = vmatprep.subr.mxu0 0.0
    %204 = vmatpush1.msra.mxu0 0.0
    %205 = vmatprep.subr.mxu0 0.0
    %206 = vmatpush1.msra.mxu0 0.0
    %207 = vmatprep.subr.mxu0 0.0
    %208 = vmatpush1.msra.mxu0 0.0
    %209 = vmatprep.subr.mxu0 0.0
    %210 = vmatpush1.msra.mxu0 0.0
    %211 = vmatprep.subr.mxu0 0.0
    %212 = vmatpush1.msra.mxu0 0.0
    %213 = vmatprep.subr.mxu0 0.0
    %214 = vmatpush1.msra.mxu0 0.0
    %215 = vmatprep.subr.mxu0 0.0
    %216 = vmatpush1.msra.mxu0 0.0
    %217 = vmatprep.subr.mxu0 0.0
    %218 = vmatpush1.msra.mxu0 0.0
    %219 = vmatprep.subr.mxu0 0.0
    %220 = vmatpush1.msra.mxu0 0.0
    %221 = vmatprep.subr.mxu0 0.0
    %222 = vmatpush1.msra.mxu0 0.0
    %223 = vmatprep.subr.mxu0 0.0
    %224 = vmatpush1.msra.mxu0 0.0
    %225 = vmatprep.subr.mxu0 0.0
    %226 = vmatpush1.msra.mxu0 0.0
    %227 = vmatprep.subr.mxu0 0.0
    %228 = vmatpush1.msra.mxu0 0.0
    %229 = vmatprep.subr.mxu0 0.0
    %230 = vmatpush1.msra.mxu0 0.0
    %231 = vmatprep.mubr.f32.mxu0 0.0
    %232 = vmatmul.mubr.f32.gmra.mrb[0].mxu0 %v72
    %v233 = vpop.f32.mrb[0].mxu0
    %v234 = vadd.f32 %v68, %v233
    %v235 = vpop.f32.mrb[0].mxu0
    %236 = vmatprep.mubr.f32.mxu0 0.0
    %237 = vmatmul.mubr.f32.gmra.mrb[0].mxu0 %v75
    %v238 = vpop.f32.mrb[0].mxu0
    %v239 = vadd.f32 %v68, %v238
    %v240 = vpop.f32.mrb[0].mxu0
    %241 = vmatprep.mubr.f32.mxu0 0.0
    %242 = vmatmul.mubr.f32.gmra.mrb[0].mxu0 %v78
    %v243 = vpop.f32.mrb[0].mxu0
    %v244 = vadd.f32 %v68, %v243
    %v245 = vpop.f32.mrb[0].mxu0
    %246 = vmatprep.mubr.f32.mxu0 0.0
    %247 = vmatmul.mubr.f32.gmra.mrb[0].mxu0 %v81
    %v248 = vpop.f32.mrb[0].mxu0
    %v249 = vadd.f32 %v68, %v248
    %v250 = vpop.f32.mrb[0].mxu0
    %251 = vmatprep.mubr.f32.mxu0 0.0
    %252 = vmatmul.mubr.f32.gmra.mrb[0].mxu0 %v84
    %v253 = vpop.f32.mrb[0].mxu0
    %v254 = vadd.f32 %v68, %v253
    %v255 = vpop.f32.mrb[0].mxu0
    %256 = vmatprep.mubr.f32.mxu0 0.0
    %257 = vmatmul.mubr.f32.gmra.mrb[0].mxu0 %v87
    %v258 = vpop.f32.mrb[0].mxu0
    %v259 = vadd.f32 %v68, %v258
    %v260 = vpop.f32.mrb[0].mxu0
    %261 = vmatprep.mubr.f32.mxu0 0.0
    %262 = vmatmul.mubr.f32.gmra.mrb[0].mxu0 %v90
    %v263 = vpop.f32.mrb[0].mxu0
    %v264 = vadd.f32 %v68, %v263
    %v265 = vpop.f32.mrb[0].mxu0
    %266 = vmatprep.mubr.f32.mxu0 0.0
    %267 = vmatmul.mubr.f32.gmra.mrb[0].mxu0 %v93
    %v268 = vpop.f32.mrb[0].mxu0
    %v269 = vadd.f32 %v68, %v268
    %v270 = vpop.f32.mrb[0].mxu0
    %271 = vmatprep.mubr.f32.mxu0 0.0
    %272 = vmatmul.mubr.f32.gmra.mrb[0].mxu0 %v96
    %v273 = vpop.f32.mrb[0].mxu0
    %v274 = vadd.f32 %v68, %v273
    %v275 = vpop.f32.mrb[0].mxu0
    %276 = vmatprep.mubr.f32.mxu0 0.0
    %277 = vmatmul.mubr.f32.gmra.mrb[0].mxu0 %v99
    %v278 = vpop.f32.mrb[0].mxu0
    %v279 = vadd.f32 %v68, %v278
    %v280 = vpop.f32.mrb[0].mxu0
    %281 = vmatprep.mubr.f32.mxu0 0.0
    %282 = vmatmul.mubr.f32.gmra.mrb[0].mxu0 %v102
    %v283 = vpop.f32.mrb[0].mxu0
    %v284 = vadd.f32 %v68, %v283
    %v285 = vpop.f32.mrb[0].mxu0
    %286 = vmatprep.mubr.f32.mxu0 0.0
    %287 = vmatmul.mubr.f32.gmra.mrb[0].mxu0 %v105
    %v288 = vpop.f32.mrb[0].mxu0
    %v289 = vadd.f32 %v68, %v288
    %v290 = vpop.f32.mrb[0].mxu0
    %291 = vmatprep.mubr.f32.mxu0 0.0
    %292 = vmatmul.mubr.f32.gmra.mrb[0].mxu0 %v108
    %v293 = vpop.f32.mrb[0].mxu0
    %v294 = vadd.f32 %v68, %v293
    %v295 = vpop.f32.mrb[0].mxu0
    %296 = vmatprep.mubr.f32.mxu0 0.0
    %297 = vmatmul.mubr.f32.gmra.mrb[0].mxu0 %v111
    %v298 = vpop.f32.mrb[0].mxu0
    %v299 = vadd.f32 %v68, %v298
    %v300 = vpop.f32.mrb[0].mxu0
    %301 = vmatprep.mubr.f32.mxu0 0.0
    %302 = vmatmul.mubr.f32.gmra.mrb[0].mxu0 %v114
    %v303 = vpop.f32.mrb[0].mxu0
    %v304 = vadd.f32 %v68, %v303
    %v305 = vpop.f32.mrb[0].mxu0
    %306 = vmatprep.mubr.f32.mxu0 0.0
    %307 = vmatmul.mubr.f32.gmra.mrb[0].mxu0 %v117
    %v308 = vpop.f32.mrb[0].mxu0
    %v309 = vadd.f32 %v68, %v308
    %v310 = vpop.f32.mrb[0].mxu0
    %311 = vmatprep.mubr.f32.mxu0 0.0
    %312 = vmatmul.mubr.f32.gmra.mrb[0].mxu0 %v120
    %v313 = vpop.f32.mrb[0].mxu0
    %v314 = vadd.f32 %v68, %v313
    %v315 = vpop.f32.mrb[0].mxu0
    %316 = vmatprep.mubr.f32.mxu0 0.0
    %317 = vmatmul.mubr.f32.gmra.mrb[0].mxu0 %v123
    %v318 = vpop.f32.mrb[0].mxu0
    %v319 = vadd.f32 %v68, %v318
    %v320 = vpop.f32.mrb[0].mxu0
    %321 = vmatprep.mubr.f32.mxu0 0.0
    %322 = vmatmul.mubr.f32.gmra.mrb[0].mxu0 %v126
    %v323 = vpop.f32.mrb[0].mxu0
    %v324 = vadd.f32 %v68, %v323
    %v325 = vpop.f32.mrb[0].mxu0
    %326 = vmatprep.mubr.f32.mxu0 0.0
    %327 = vmatmul.mubr.f32.gmra.mrb[0].mxu0 %v129
    %v328 = vpop.f32.mrb[0].mxu0
    %v329 = vadd.f32 %v68, %v328
    %v330 = vpop.f32.mrb[0].mxu0
    %331 = vmatprep.mubr.f32.mxu0 0.0
    %332 = vmatmul.mubr.f32.gmra.mrb[0].mxu0 %v132
    %v333 = vpop.f32.mrb[0].mxu0
    %v334 = vadd.f32 %v68, %v333
    %v335 = vpop.f32.mrb[0].mxu0
    %336 = vmatprep.mubr.f32.mxu0 0.0
    %337 = vmatmul.mubr.f32.gmra.mrb[0].mxu0 %v135
    %v338 = vpop.f32.mrb[0].mxu0
    %v339 = vadd.f32 %v68, %v338
    %v340 = vpop.f32.mrb[0].mxu0
    %341 = vmatprep.mubr.f32.mxu0 0.0
    %342 = vmatmul.mubr.f32.gmra.mrb[0].mxu0 %v138
    %v343 = vpop.f32.mrb[0].mxu0
    %v344 = vadd.f32 %v68, %v343
    %v345 = vpop.f32.mrb[0].mxu0
    %346 = vmatprep.mubr.f32.mxu0 0.0
    %347 = vmatmul.mubr.f32.gmra.mrb[0].mxu0 %v141
    %v348 = vpop.f32.mrb[0].mxu0
    %v349 = vadd.f32 %v68, %v348
    %v350 = vpop.f32.mrb[0].mxu0
    %351 = vmatprep.mubr.f32.mxu0 0.0
    %352 = vmatmul.mubr.f32.gmra.mrb[0].mxu0 %v144
    %v353 = vpop.f32.mrb[0].mxu0
    %v354 = vadd.f32 %v68, %v353
    %v355 = vpop.f32.mrb[0].mxu0
    %356 = vmatprep.mubr.f32.mxu0 0.0
    %357 = vmatmul.mubr.f32.gmra.mrb[0].mxu0 %v147
    %v358 = vpop.f32.mrb[0].mxu0
    %v359 = vadd.f32 %v68, %v358
    %v360 = vpop.f32.mrb[0].mxu0
    %361 = vmatprep.mubr.f32.mxu0 0.0
    %362 = vmatmul.mubr.f32.gmra.mrb[0].mxu0 %v150
    %v363 = vpop.f32.mrb[0].mxu0
    %v364 = vadd.f32 %v68, %v363
    %v365 = vpop.f32.mrb[0].mxu0
    %366 = vmatprep.mubr.f32.mxu0 0.0
    %367 = vmatmul.mubr.f32.gmra.mrb[0].mxu0 %v153
    %v368 = vpop.f32.mrb[0].mxu0
    %v369 = vadd.f32 %v68, %v368
    %v370 = vpop.f32.mrb[0].mxu0
    %371 = vmatprep.mubr.f32.mxu0 0.0
    %372 = vmatmul.mubr.f32.gmra.mrb[0].mxu0 %v156
    %v373 = vpop.f32.mrb[0].mxu0
    %v374 = vadd.f32 %v68, %v373
    %v375 = vpop.f32.mrb[0].mxu0
    %376 = vmatprep.mubr.f32.mxu0 0.0
    %377 = vmatmul.mubr.f32.gmra.mrb[0].mxu0 %v159
    %v378 = vpop.f32.mrb[0].mxu0
    %v379 = vadd.f32 %v68, %v378
    %v380 = vpop.f32.mrb[0].mxu0
    %381 = vmatprep.mubr.f32.mxu0 0.0
    %382 = vmatmul.mubr.f32.gmra.mrb[0].mxu0 %v162
    %v383 = vpop.f32.mrb[0].mxu0
    %v384 = vadd.f32 %v68, %v383
    %v385 = vpop.f32.mrb[0].mxu0
    %386 = vmatprep.mubr.f32.mxu0 0.0
    %387 = vmatmul.mubr.f32.gmra.mrb[0].mxu0 %v165
    %v388 = vpop.f32.mrb[0].mxu0
    %v389 = vadd.f32 %v68, %v388
    %v390 = vpop.f32.mrb[0].mxu0
    %391 = vdwg.mxu0
    %v392 = vmax.f32 %v234, 0.0
    %v393 = vmax.f32 %v239, 0.0
    %v394 = vmax.f32 %v244, 0.0
    %v395 = vmax.f32 %v249, 0.0
    %v396 = vmax.f32 %v254, 0.0
    %v397 = vmax.f32 %v259, 0.0
    %v398 = vmax.f32 %v264, 0.0
    %v399 = vmax.f32 %v269, 0.0
    %v400 = vmax.f32 %v274, 0.0
    %v401 = vmax.f32 %v279, 0.0
    %v402 = vmax.f32 %v284, 0.0
    %v403 = vmax.f32 %v289, 0.0
    %v404 = vmax.f32 %v294, 0.0
    %v405 = vmax.f32 %v299, 0.0
    %v406 = vmax.f32 %v304, 0.0
    %v407 = vmax.f32 %v309, 0.0
    %v408 = vmax.f32 %v314, 0.0
    %v409 = vmax.f32 %v319, 0.0
    %v410 = vmax.f32 %v324, 0.0
    %v411 = vmax.f32 %v329, 0.0
    %v412 = vmax.f32 %v334, 0.0
    %v413 = vmax.f32 %v339, 0.0
    %v414 = vmax.f32 %v344, 0.0
    %v415 = vmax.f32 %v349, 0.0
    %v416 = vmax.f32 %v354, 0.0
    %v417 = vmax.f32 %v359, 0.0
    %v418 = vmax.f32 %v364, 0.0
    %v419 = vmax.f32 %v369, 0.0
    %v420 = vmax.f32 %v374, 0.0
    %v421 = vmax.f32 %v379, 0.0
    %v422 = vmax.f32 %v384, 0.0
    %v423 = vmax.f32 %v389, 0.0
    %v424 = vld [vmem:[%s3] sm:$0xff]
    %v425 = vld [vmem:[%s3 + $0x8] sm:$0xff]
    %v426 = vld [vmem:[%s3 + $0x10] sm:$0xff]
    %v427 = vld [vmem:[%s3 + $0x18] sm:$0xff]
    %v428 = vld [vmem:[%s3 + $0x20] sm:$0xff]
    %v429 = vld [vmem:[%s3 + $0x28] sm:$0xff]
    %v430 = vld [vmem:[%s3 + $0x30] sm:$0xff]
    %v431 = vld [vmem:[%s3 + $0x38] sm:$0xff]
    %v432 = vld [vmem:[%s4] sm:$0x1]
    %v434 = vlaneseq
    %v435 = vshrl.u32 %v434, 7
    %v436 = vsub.s32 0, %v435
    %v437 = vrot.slane %v432, %v436
    %vm439 = vcmask 523264
    %v441 = vsel %vm439, %v392, 0
    %v444 = vsel %vm439, %v393, 0
    %v447 = vsel %vm439, %v394, 0
    %v450 = vsel %vm439, %v395, 0
    %v453 = vsel %vm439, %v396, 0
    %v456 = vsel %vm439, %v397, 0
    %v459 = vsel %vm439, %v398, 0
    %v462 = vsel %vm439, %v399, 0
    %v465 = vsel %vm439, %v400, 0
    %v468 = vsel %vm439, %v401, 0
    %v471 = vsel %vm439, %v402, 0
    %v474 = vsel %vm439, %v403, 0
    %v477 = vsel %vm439, %v404, 0
    %v480 = vsel %vm439, %v405, 0
    %v483 = vsel %vm439, %v406, 0
    %v486 = vsel %vm439, %v407, 0
    %v489 = vsel %vm439, %v408, 0
    %v492 = vsel %vm439, %v409, 0
    %v495 = vsel %vm439, %v410, 0
    %v498 = vsel %vm439, %v411, 0
    %v501 = vsel %vm439, %v412, 0
    %v504 = vsel %vm439, %v413, 0
    %v507 = vsel %vm439, %v414, 0
    %v510 = vsel %vm439, %v415, 0
    %v513 = vsel %vm439, %v416, 0
    %v516 = vsel %vm439, %v417, 0
    %v519 = vsel %vm439, %v418, 0
    %v522 = vsel %vm439, %v419, 0
    %v525 = vsel %vm439, %v420, 0
    %v528 = vsel %vm439, %v421, 0
    %v531 = vsel %vm439, %v422, 0
    %v534 = vsel %vm439, %v423, 0
    %536 = vmatprep.subr.mxu0 0.0
    %537 = vmatpush1.msra.mxu0 %v424
    %538 = vmatprep.subr.mxu0 0.0
    %539 = vmatpush1.msra.mxu0 %v425
    %540 = vmatprep.subr.mxu0 0.0
    %541 = vmatpush1.msra.mxu0 %v426
    %542 = vmatprep.subr.mxu0 0.0
    %543 = vmatpush1.msra.mxu0 %v427
    %544 = vmatprep.subr.mxu0 0.0
    %545 = vmatpush1.msra.mxu0 %v428
    %546 = vmatprep.subr.mxu0 0.0
    %547 = vmatpush1.msra.mxu0 %v429
    %548 = vmatprep.subr.mxu0 0.0
    %549 = vmatpush1.msra.mxu0 %v430
    %550 = vmatprep.subr.mxu0 0.0
    %551 = vmatpush1.msra.mxu0 %v431
    %552 = vmatprep.subr.mxu0 0.0
    %553 = vmatpush1.msra.mxu0 0.0
    %554 = vmatprep.subr.mxu0 0.0
    %555 = vmatpush1.msra.mxu0 0.0
    %556 = vmatprep.subr.mxu0 0.0
    %557 = vmatpush1.msra.mxu0 0.0
    %558 = vmatprep.subr.mxu0 0.0
    %559 = vmatpush1.msra.mxu0 0.0
    %560 = vmatprep.subr.mxu0 0.0
    %561 = vmatpush1.msra.mxu0 0.0
    %562 = vmatprep.subr.mxu0 0.0
    %563 = vmatpush1.msra.mxu0 0.0
    %564 = vmatprep.subr.mxu0 0.0
    %565 = vmatpush1.msra.mxu0 0.0
    %566 = vmatprep.subr.mxu0 0.0
    %567 = vmatpush1.msra.mxu0 0.0
    %568 = vmatprep.subr.mxu0 0.0
    %569 = vmatpush1.msra.mxu0 0.0
    %570 = vmatprep.subr.mxu0 0.0
    %571 = vmatpush1.msra.mxu0 0.0
    %572 = vmatprep.subr.mxu0 0.0
    %573 = vmatpush1.msra.mxu0 0.0
    %574 = vmatprep.subr.mxu0 0.0
    %575 = vmatpush1.msra.mxu0 0.0
    %576 = vmatprep.subr.mxu0 0.0
    %577 = vmatpush1.msra.mxu0 0.0
    %578 = vmatprep.subr.mxu0 0.0
    %579 = vmatpush1.msra.mxu0 0.0
    %580 = vmatprep.subr.mxu0 0.0
    %581 = vmatpush1.msra.mxu0 0.0
    %582 = vmatprep.subr.mxu0 0.0
    %583 = vmatpush1.msra.mxu0 0.0
    %584 = vmatprep.subr.mxu0 0.0
    %585 = vmatpush1.msra.mxu0 0.0
    %586 = vmatprep.subr.mxu0 0.0
    %587 = vmatpush1.msra.mxu0 0.0
    %588 = vmatprep.subr.mxu0 0.0
    %589 = vmatpush1.msra.mxu0 0.0
    %590 = vmatprep.subr.mxu0 0.0
    %591 = vmatpush1.msra.mxu0 0.0
    %592 = vmatprep.subr.mxu0 0.0
    %593 = vmatpush1.msra.mxu0 0.0
    %594 = vmatprep.subr.mxu0 0.0
    %595 = vmatpush1.msra.mxu0 0.0
    %596 = vmatprep.subr.mxu0 0.0
    %597 = vmatpush1.msra.mxu0 0.0
    %598 = vmatprep.subr.mxu0 0.0
    %599 = vmatpush1.msra.mxu0 0.0
    %600 = vmatprep.mubr.f32.mxu0 0.0
    %601 = vmatmul.mubr.f32.gmra.mrb[0].mxu0 %v441
    %v602 = vpop.f32.mrb[0].mxu0
    %v603 = vadd.f32 %v437, %v602
    %v604 = vpop.f32.mrb[0].mxu0
    %605 = vmatprep.mubr.f32.mxu0 0.0
    %606 = vmatmul.mubr.f32.gmra.mrb[0].mxu0 %v444
    %v607 = vpop.f32.mrb[0].mxu0
    %v608 = vadd.f32 %v437, %v607
    %v609 = vpop.f32.mrb[0].mxu0
    %610 = vmatprep.mubr.f32.mxu0 0.0
    %611 = vmatmul.mubr.f32.gmra.mrb[0].mxu0 %v447
    %v612 = vpop.f32.mrb[0].mxu0
    %v613 = vadd.f32 %v437, %v612
    %v614 = vpop.f32.mrb[0].mxu0
    %615 = vmatprep.mubr.f32.mxu0 0.0
    %616 = vmatmul.mubr.f32.gmra.mrb[0].mxu0 %v450
    %v617 = vpop.f32.mrb[0].mxu0
    %v618 = vadd.f32 %v437, %v617
    %v619 = vpop.f32.mrb[0].mxu0
    %620 = vmatprep.mubr.f32.mxu0 0.0
    %621 = vmatmul.mubr.f32.gmra.mrb[0].mxu0 %v453
    %v622 = vpop.f32.mrb[0].mxu0
    %v623 = vadd.f32 %v437, %v622
    %v624 = vpop.f32.mrb[0].mxu0
    %625 = vmatprep.mubr.f32.mxu0 0.0
    %626 = vmatmul.mubr.f32.gmra.mrb[0].mxu0 %v456
    %v627 = vpop.f32.mrb[0].mxu0
    %v628 = vadd.f32 %v437, %v627
    %v629 = vpop.f32.mrb[0].mxu0
    %630 = vmatprep.mubr.f32.mxu0 0.0
    %631 = vmatmul.mubr.f32.gmra.mrb[0].mxu0 %v459
    %v632 = vpop.f32.mrb[0].mxu0
    %v633 = vadd.f32 %v437, %v632
    %v634 = vpop.f32.mrb[0].mxu0
    %635 = vmatprep.mubr.f32.mxu0 0.0
    %636 = vmatmul.mubr.f32.gmra.mrb[0].mxu0 %v462
    %v637 = vpop.f32.mrb[0].mxu0
    %v638 = vadd.f32 %v437, %v637
    %v639 = vpop.f32.mrb[0].mxu0
    %640 = vmatprep.mubr.f32.mxu0 0.0
    %641 = vmatmul.mubr.f32.gmra.mrb[0].mxu0 %v465
    %v642 = vpop.f32.mrb[0].mxu0
    %v643 = vadd.f32 %v437, %v642
    %v644 = vpop.f32.mrb[0].mxu0
    %645 = vmatprep.mubr.f32.mxu0 0.0
    %646 = vmatmul.mubr.f32.gmra.mrb[0].mxu0 %v468
    %v647 = vpop.f32.mrb[0].mxu0
    %v648 = vadd.f32 %v437, %v647
    %v649 = vpop.f32.mrb[0].mxu0
    %650 = vmatprep.mubr.f32.mxu0 0.0
    %651 = vmatmul.mubr.f32.gmra.mrb[0].mxu0 %v471
    %v652 = vpop.f32.mrb[0].mxu0
    %v653 = vadd.f32 %v437, %v652
    %v654 = vpop.f32.mrb[0].mxu0
    %655 = vmatprep.mubr.f32.mxu0 0.0
    %656 = vmatmul.mubr.f32.gmra.mrb[0].mxu0 %v474
    %v657 = vpop.f32.mrb[0].mxu0
    %v658 = vadd.f32 %v437, %v657
    %v659 = vpop.f32.mrb[0].mxu0
    %660 = vmatprep.mubr.f32.mxu0 0.0
    %661 = vmatmul.mubr.f32.gmra.mrb[0].mxu0 %v477
    %v662 = vpop.f32.mrb[0].mxu0
    %v663 = vadd.f32 %v437, %v662
    %v664 = vpop.f32.mrb[0].mxu0
    %665 = vmatprep.mubr.f32.mxu0 0.0
    %666 = vmatmul.mubr.f32.gmra.mrb[0].mxu0 %v480
    %v667 = vpop.f32.mrb[0].mxu0
    %v668 = vadd.f32 %v437, %v667
    %v669 = vpop.f32.mrb[0].mxu0
    %670 = vmatprep.mubr.f32.mxu0 0.0
    %671 = vmatmul.mubr.f32.gmra.mrb[0].mxu0 %v483
    %v672 = vpop.f32.mrb[0].mxu0
    %v673 = vadd.f32 %v437, %v672
    %v674 = vpop.f32.mrb[0].mxu0
    %675 = vmatprep.mubr.f32.mxu0 0.0
    %676 = vmatmul.mubr.f32.gmra.mrb[0].mxu0 %v486
    %v677 = vpop.f32.mrb[0].mxu0
    %v678 = vadd.f32 %v437, %v677
    %v679 = vpop.f32.mrb[0].mxu0
    %680 = vmatprep.mubr.f32.mxu0 0.0
    %681 = vmatmul.mubr.f32.gmra.mrb[0].mxu0 %v489
    %v682 = vpop.f32.mrb[0].mxu0
    %v683 = vadd.f32 %v437, %v682
    %v684 = vpop.f32.mrb[0].mxu0
    %685 = vmatprep.mubr.f32.mxu0 0.0
    %686 = vmatmul.mubr.f32.gmra.mrb[0].mxu0 %v492
    %v687 = vpop.f32.mrb[0].mxu0
    %v688 = vadd.f32 %v437, %v687
    %v689 = vpop.f32.mrb[0].mxu0
    %690 = vmatprep.mubr.f32.mxu0 0.0
    %691 = vmatmul.mubr.f32.gmra.mrb[0].mxu0 %v495
    %v692 = vpop.f32.mrb[0].mxu0
    %v693 = vadd.f32 %v437, %v692
    %v694 = vpop.f32.mrb[0].mxu0
    %695 = vmatprep.mubr.f32.mxu0 0.0
    %696 = vmatmul.mubr.f32.gmra.mrb[0].mxu0 %v498
    %v697 = vpop.f32.mrb[0].mxu0
    %v698 = vadd.f32 %v437, %v697
    %v699 = vpop.f32.mrb[0].mxu0
    %700 = vmatprep.mubr.f32.mxu0 0.0
    %701 = vmatmul.mubr.f32.gmra.mrb[0].mxu0 %v501
    %v702 = vpop.f32.mrb[0].mxu0
    %v703 = vadd.f32 %v437, %v702
    %v704 = vpop.f32.mrb[0].mxu0
    %705 = vmatprep.mubr.f32.mxu0 0.0
    %706 = vmatmul.mubr.f32.gmra.mrb[0].mxu0 %v504
    %v707 = vpop.f32.mrb[0].mxu0
    %v708 = vadd.f32 %v437, %v707
    %v709 = vpop.f32.mrb[0].mxu0
    %710 = vmatprep.mubr.f32.mxu0 0.0
    %711 = vmatmul.mubr.f32.gmra.mrb[0].mxu0 %v507
    %v712 = vpop.f32.mrb[0].mxu0
    %v713 = vadd.f32 %v437, %v712
    %v714 = vpop.f32.mrb[0].mxu0
    %715 = vmatprep.mubr.f32.mxu0 0.0
    %716 = vmatmul.mubr.f32.gmra.mrb[0].mxu0 %v510
    %v717 = vpop.f32.mrb[0].mxu0
    %v718 = vadd.f32 %v437, %v717
    %v719 = vpop.f32.mrb[0].mxu0
    %720 = vmatprep.mubr.f32.mxu0 0.0
    %721 = vmatmul.mubr.f32.gmra.mrb[0].mxu0 %v513
    %v722 = vpop.f32.mrb[0].mxu0
    %v723 = vadd.f32 %v437, %v722
    %v724 = vpop.f32.mrb[0].mxu0
    %725 = vmatprep.mubr.f32.mxu0 0.0
    %726 = vmatmul.mubr.f32.gmra.mrb[0].mxu0 %v516
    %v727 = vpop.f32.mrb[0].mxu0
    %v728 = vadd.f32 %v437, %v727
    %v729 = vpop.f32.mrb[0].mxu0
    %730 = vmatprep.mubr.f32.mxu0 0.0
    %731 = vmatmul.mubr.f32.gmra.mrb[0].mxu0 %v519
    %v732 = vpop.f32.mrb[0].mxu0
    %v733 = vadd.f32 %v437, %v732
    %v734 = vpop.f32.mrb[0].mxu0
    %735 = vmatprep.mubr.f32.mxu0 0.0
    %736 = vmatmul.mubr.f32.gmra.mrb[0].mxu0 %v522
    %v737 = vpop.f32.mrb[0].mxu0
    %v738 = vadd.f32 %v437, %v737
    %v739 = vpop.f32.mrb[0].mxu0
    %740 = vmatprep.mubr.f32.mxu0 0.0
    %741 = vmatmul.mubr.f32.gmra.mrb[0].mxu0 %v525
    %v742 = vpop.f32.mrb[0].mxu0
    %v743 = vadd.f32 %v437, %v742
    %v744 = vpop.f32.mrb[0].mxu0
    %745 = vmatprep.mubr.f32.mxu0 0.0
    %746 = vmatmul.mubr.f32.gmra.mrb[0].mxu0 %v528
    %v747 = vpop.f32.mrb[0].mxu0
    %v748 = vadd.f32 %v437, %v747
    %v749 = vpop.f32.mrb[0].mxu0
    %750 = vmatprep.mubr.f32.mxu0 0.0
    %751 = vmatmul.mubr.f32.gmra.mrb[0].mxu0 %v531
    %v752 = vpop.f32.mrb[0].mxu0
    %v753 = vadd.f32 %v437, %v752
    %v754 = vpop.f32.mrb[0].mxu0
    %755 = vmatprep.mubr.f32.mxu0 0.0
    %756 = vmatmul.mubr.f32.gmra.mrb[0].mxu0 %v534
    %v757 = vpop.f32.mrb[0].mxu0
    %v758 = vadd.f32 %v437, %v757
    %v759 = vpop.f32.mrb[0].mxu0
    %760 = vdwg.mxu0
    %v761 = vmax.f32 %v603, 0.0
    %v762 = vmax.f32 %v608, 0.0
    %v763 = vmax.f32 %v613, 0.0
    %v764 = vmax.f32 %v618, 0.0
    %v765 = vmax.f32 %v623, 0.0
    %v766 = vmax.f32 %v628, 0.0
    %v767 = vmax.f32 %v633, 0.0
    %v768 = vmax.f32 %v638, 0.0
    %v769 = vmax.f32 %v643, 0.0
    %v770 = vmax.f32 %v648, 0.0
    %v771 = vmax.f32 %v653, 0.0
    %v772 = vmax.f32 %v658, 0.0
    %v773 = vmax.f32 %v663, 0.0
    %v774 = vmax.f32 %v668, 0.0
    %v775 = vmax.f32 %v673, 0.0
    %v776 = vmax.f32 %v678, 0.0
    %v777 = vmax.f32 %v683, 0.0
    %v778 = vmax.f32 %v688, 0.0
    %v779 = vmax.f32 %v693, 0.0
    %v780 = vmax.f32 %v698, 0.0
    %v781 = vmax.f32 %v703, 0.0
    %v782 = vmax.f32 %v708, 0.0
    %v783 = vmax.f32 %v713, 0.0
    %v784 = vmax.f32 %v718, 0.0
    %v785 = vmax.f32 %v723, 0.0
    %v786 = vmax.f32 %v728, 0.0
    %v787 = vmax.f32 %v733, 0.0
    %v788 = vmax.f32 %v738, 0.0
    %v789 = vmax.f32 %v743, 0.0
    %v790 = vmax.f32 %v748, 0.0
    %v791 = vmax.f32 %v753, 0.0
    %v792 = vmax.f32 %v758, 0.0
    %v793 = vld [vmem:[%s5] sm:$0xff]
    %v794 = vld [vmem:[%s5 + $0x8] sm:$0xff]
    %v795 = vld [vmem:[%s5 + $0x10] sm:$0xff]
    %v796 = vld [vmem:[%s5 + $0x18] sm:$0xff]
    %v797 = vld [vmem:[%s6] sm:$0x1]
    %v799 = vlaneseq
    %v800 = vshrl.u32 %v799, 7
    %v801 = vsub.s32 0, %v800
    %v802 = vrot.slane %v797, %v801
    %v805 = vsel %vm70, %v761, 0
    %v808 = vsel %vm70, %v762, 0
    %v811 = vsel %vm70, %v763, 0
    %v814 = vsel %vm70, %v764, 0
    %v817 = vsel %vm70, %v765, 0
    %v820 = vsel %vm70, %v766, 0
    %v823 = vsel %vm70, %v767, 0
    %v826 = vsel %vm70, %v768, 0
    %v829 = vsel %vm70, %v769, 0
    %v832 = vsel %vm70, %v770, 0
    %v835 = vsel %vm70, %v771, 0
    %v838 = vsel %vm70, %v772, 0
    %v841 = vsel %vm70, %v773, 0
    %v844 = vsel %vm70, %v774, 0
    %v847 = vsel %vm70, %v775, 0
    %v850 = vsel %vm70, %v776, 0
    %v853 = vsel %vm70, %v777, 0
    %v856 = vsel %vm70, %v778, 0
    %v859 = vsel %vm70, %v779, 0
    %v862 = vsel %vm70, %v780, 0
    %v865 = vsel %vm70, %v781, 0
    %v868 = vsel %vm70, %v782, 0
    %v871 = vsel %vm70, %v783, 0
    %v874 = vsel %vm70, %v784, 0
    %v877 = vsel %vm70, %v785, 0
    %v880 = vsel %vm70, %v786, 0
    %v883 = vsel %vm70, %v787, 0
    %v886 = vsel %vm70, %v788, 0
    %v889 = vsel %vm70, %v789, 0
    %v892 = vsel %vm70, %v790, 0
    %v895 = vsel %vm70, %v791, 0
    %v898 = vsel %vm70, %v792, 0
    %900 = vmatprep.subr.mxu0 0.0
    %901 = vmatpush1.msra.mxu0 %v793
    %902 = vmatprep.subr.mxu0 0.0
    %903 = vmatpush1.msra.mxu0 %v794
    %904 = vmatprep.subr.mxu0 0.0
    %905 = vmatpush1.msra.mxu0 %v795
    %906 = vmatprep.subr.mxu0 0.0
    %907 = vmatpush1.msra.mxu0 %v796
    %908 = vmatprep.subr.mxu0 0.0
    %909 = vmatpush1.msra.mxu0 0.0
    %910 = vmatprep.subr.mxu0 0.0
    %911 = vmatpush1.msra.mxu0 0.0
    %912 = vmatprep.subr.mxu0 0.0
    %913 = vmatpush1.msra.mxu0 0.0
    %914 = vmatprep.subr.mxu0 0.0
    %915 = vmatpush1.msra.mxu0 0.0
    %916 = vmatprep.subr.mxu0 0.0
    %917 = vmatpush1.msra.mxu0 0.0
    %918 = vmatprep.subr.mxu0 0.0
    %919 = vmatpush1.msra.mxu0 0.0
    %920 = vmatprep.subr.mxu0 0.0
    %921 = vmatpush1.msra.mxu0 0.0
    %922 = vmatprep.subr.mxu0 0.0
    %923 = vmatpush1.msra.mxu0 0.0
    %924 = vmatprep.subr.mxu0 0.0
    %925 = vmatpush1.msra.mxu0 0.0
    %926 = vmatprep.subr.mxu0 0.0
    %927 = vmatpush1.msra.mxu0 0.0
    %928 = vmatprep.subr.mxu0 0.0
    %929 = vmatpush1.msra.mxu0 0.0
    %930 = vmatprep.subr.mxu0 0.0
    %931 = vmatpush1.msra.mxu0 0.0
    %932 = vmatprep.subr.mxu0 0.0
    %933 = vmatpush1.msra.mxu0 0.0
    %934 = vmatprep.subr.mxu0 0.0
    %935 = vmatpush1.msra.mxu0 0.0
    %936 = vmatprep.subr.mxu0 0.0
    %937 = vmatpush1.msra.mxu0 0.0
    %938 = vmatprep.subr.mxu0 0.0
    %939 = vmatpush1.msra.mxu0 0.0
    %940 = vmatprep.subr.mxu0 0.0
    %941 = vmatpush1.msra.mxu0 0.0
    %942 = vmatprep.subr.mxu0 0.0
    %943 = vmatpush1.msra.mxu0 0.0
    %944 = vmatprep.subr.mxu0 0.0
    %945 = vmatpush1.msra.mxu0 0.0
    %946 = vmatprep.subr.mxu0 0.0
    %947 = vmatpush1.msra.mxu0 0.0
    %948 = vmatprep.subr.mxu0 0.0
    %949 = vmatpush1.msra.mxu0 0.0
    %950 = vmatprep.subr.mxu0 0.0
    %951 = vmatpush1.msra.mxu0 0.0
    %952 = vmatprep.subr.mxu0 0.0
    %953 = vmatpush1.msra.mxu0 0.0
    %954 = vmatprep.subr.mxu0 0.0
    %955 = vmatpush1.msra.mxu0 0.0
    %956 = vmatprep.subr.mxu0 0.0
    %957 = vmatpush1.msra.mxu0 0.0
    %958 = vmatprep.subr.mxu0 0.0
    %959 = vmatpush1.msra.mxu0 0.0
    %960 = vmatprep.subr.mxu0 0.0
    %961 = vmatpush1.msra.mxu0 0.0
    %962 = vmatprep.subr.mxu0 0.0
    %963 = vmatpush1.msra.mxu0 0.0
    %964 = vmatprep.mubr.f32.mxu0 0.0
    %965 = vmatmul.mubr.f32.gmra.mrb[0].mxu0 %v805
    %v966 = vpop.f32.mrb[0].mxu0
    %v967 = vadd.f32 %v802, %v966
    %v968 = vpop.f32.mrb[0].mxu0
    %969 = vmatprep.mubr.f32.mxu0 0.0
    %970 = vmatmul.mubr.f32.gmra.mrb[0].mxu0 %v808
    %v971 = vpop.f32.mrb[0].mxu0
    %v972 = vadd.f32 %v802, %v971
    %v973 = vpop.f32.mrb[0].mxu0
    %974 = vmatprep.mubr.f32.mxu0 0.0
    %975 = vmatmul.mubr.f32.gmra.mrb[0].mxu0 %v811
    %v976 = vpop.f32.mrb[0].mxu0
    %v977 = vadd.f32 %v802, %v976
    %v978 = vpop.f32.mrb[0].mxu0
    %979 = vmatprep.mubr.f32.mxu0 0.0
    %980 = vmatmul.mubr.f32.gmra.mrb[0].mxu0 %v814
    %v981 = vpop.f32.mrb[0].mxu0
    %v982 = vadd.f32 %v802, %v981
    %v983 = vpop.f32.mrb[0].mxu0
    %984 = vmatprep.mubr.f32.mxu0 0.0
    %985 = vmatmul.mubr.f32.gmra.mrb[0].mxu0 %v817
    %v986 = vpop.f32.mrb[0].mxu0
    %v987 = vadd.f32 %v802, %v986
    %v988 = vpop.f32.mrb[0].mxu0
    %989 = vmatprep.mubr.f32.mxu0 0.0
    %990 = vmatmul.mubr.f32.gmra.mrb[0].mxu0 %v820
    %v991 = vpop.f32.mrb[0].mxu0
    %v992 = vadd.f32 %v802, %v991
    %v993 = vpop.f32.mrb[0].mxu0
    %994 = vmatprep.mubr.f32.mxu0 0.0
    %995 = vmatmul.mubr.f32.gmra.mrb[0].mxu0 %v823
    %v996 = vpop.f32.mrb[0].mxu0
    %v997 = vadd.f32 %v802, %v996
    %v998 = vpop.f32.mrb[0].mxu0
    %999 = vmatprep.mubr.f32.mxu0 0.0
    %1000 = vmatmul.mubr.f32.gmra.mrb[0].mxu0 %v826
    %v1001 = vpop.f32.mrb[0].mxu0
    %v1002 = vadd.f32 %v802, %v1001
    %v1003 = vpop.f32.mrb[0].mxu0
    %1004 = vmatprep.mubr.f32.mxu0 0.0
    %1005 = vmatmul.mubr.f32.gmra.mrb[0].mxu0 %v829
    %v1006 = vpop.f32.mrb[0].mxu0
    %v1007 = vadd.f32 %v802, %v1006
    %v1008 = vpop.f32.mrb[0].mxu0
    %1009 = vmatprep.mubr.f32.mxu0 0.0
    %1010 = vmatmul.mubr.f32.gmra.mrb[0].mxu0 %v832
    %v1011 = vpop.f32.mrb[0].mxu0
    %v1012 = vadd.f32 %v802, %v1011
    %v1013 = vpop.f32.mrb[0].mxu0
    %1014 = vmatprep.mubr.f32.mxu0 0.0
    %1015 = vmatmul.mubr.f32.gmra.mrb[0].mxu0 %v835
    %v1016 = vpop.f32.mrb[0].mxu0
    %v1017 = vadd.f32 %v802, %v1016
    %v1018 = vpop.f32.mrb[0].mxu0
    %1019 = vmatprep.mubr.f32.mxu0 0.0
    %1020 = vmatmul.mubr.f32.gmra.mrb[0].mxu0 %v838
    %v1021 = vpop.f32.mrb[0].mxu0
    %v1022 = vadd.f32 %v802, %v1021
    %v1023 = vpop.f32.mrb[0].mxu0
    %1024 = vmatprep.mubr.f32.mxu0 0.0
    %1025 = vmatmul.mubr.f32.gmra.mrb[0].mxu0 %v841
    %v1026 = vpop.f32.mrb[0].mxu0
    %v1027 = vadd.f32 %v802, %v1026
    %v1028 = vpop.f32.mrb[0].mxu0
    %1029 = vmatprep.mubr.f32.mxu0 0.0
    %1030 = vmatmul.mubr.f32.gmra.mrb[0].mxu0 %v844
    %v1031 = vpop.f32.mrb[0].mxu0
    %v1032 = vadd.f32 %v802, %v1031
    %v1033 = vpop.f32.mrb[0].mxu0
    %1034 = vmatprep.mubr.f32.mxu0 0.0
    %1035 = vmatmul.mubr.f32.gmra.mrb[0].mxu0 %v847
    %v1036 = vpop.f32.mrb[0].mxu0
    %v1037 = vadd.f32 %v802, %v1036
    %v1038 = vpop.f32.mrb[0].mxu0
    %1039 = vmatprep.mubr.f32.mxu0 0.0
    %1040 = vmatmul.mubr.f32.gmra.mrb[0].mxu0 %v850
    %v1041 = vpop.f32.mrb[0].mxu0
    %v1042 = vadd.f32 %v802, %v1041
    %v1043 = vpop.f32.mrb[0].mxu0
    %1044 = vmatprep.mubr.f32.mxu0 0.0
    %1045 = vmatmul.mubr.f32.gmra.mrb[0].mxu0 %v853
    %v1046 = vpop.f32.mrb[0].mxu0
    %v1047 = vadd.f32 %v802, %v1046
    %v1048 = vpop.f32.mrb[0].mxu0
    %1049 = vmatprep.mubr.f32.mxu0 0.0
    %1050 = vmatmul.mubr.f32.gmra.mrb[0].mxu0 %v856
    %v1051 = vpop.f32.mrb[0].mxu0
    %v1052 = vadd.f32 %v802, %v1051
    %v1053 = vpop.f32.mrb[0].mxu0
    %1054 = vmatprep.mubr.f32.mxu0 0.0
    %1055 = vmatmul.mubr.f32.gmra.mrb[0].mxu0 %v859
    %v1056 = vpop.f32.mrb[0].mxu0
    %v1057 = vadd.f32 %v802, %v1056
    %v1058 = vpop.f32.mrb[0].mxu0
    %1059 = vmatprep.mubr.f32.mxu0 0.0
    %1060 = vmatmul.mubr.f32.gmra.mrb[0].mxu0 %v862
    %v1061 = vpop.f32.mrb[0].mxu0
    %v1062 = vadd.f32 %v802, %v1061
    %v1063 = vpop.f32.mrb[0].mxu0
    %1064 = vmatprep.mubr.f32.mxu0 0.0
    %1065 = vmatmul.mubr.f32.gmra.mrb[0].mxu0 %v865
    %v1066 = vpop.f32.mrb[0].mxu0
    %v1067 = vadd.f32 %v802, %v1066
    %v1068 = vpop.f32.mrb[0].mxu0
    %1069 = vmatprep.mubr.f32.mxu0 0.0
    %1070 = vmatmul.mubr.f32.gmra.mrb[0].mxu0 %v868
    %v1071 = vpop.f32.mrb[0].mxu0
    %v1072 = vadd.f32 %v802, %v1071
    %v1073 = vpop.f32.mrb[0].mxu0
    %1074 = vmatprep.mubr.f32.mxu0 0.0
    %1075 = vmatmul.mubr.f32.gmra.mrb[0].mxu0 %v871
    %v1076 = vpop.f32.mrb[0].mxu0
    %v1077 = vadd.f32 %v802, %v1076
    %v1078 = vpop.f32.mrb[0].mxu0
    %1079 = vmatprep.mubr.f32.mxu0 0.0
    %1080 = vmatmul.mubr.f32.gmra.mrb[0].mxu0 %v874
    %v1081 = vpop.f32.mrb[0].mxu0
    %v1082 = vadd.f32 %v802, %v1081
    %v1083 = vpop.f32.mrb[0].mxu0
    %1084 = vmatprep.mubr.f32.mxu0 0.0
    %1085 = vmatmul.mubr.f32.gmra.mrb[0].mxu0 %v877
    %v1086 = vpop.f32.mrb[0].mxu0
    %v1087 = vadd.f32 %v802, %v1086
    %v1088 = vpop.f32.mrb[0].mxu0
    %1089 = vmatprep.mubr.f32.mxu0 0.0
    %1090 = vmatmul.mubr.f32.gmra.mrb[0].mxu0 %v880
    %v1091 = vpop.f32.mrb[0].mxu0
    %v1092 = vadd.f32 %v802, %v1091
    %v1093 = vpop.f32.mrb[0].mxu0
    %1094 = vmatprep.mubr.f32.mxu0 0.0
    %1095 = vmatmul.mubr.f32.gmra.mrb[0].mxu0 %v883
    %v1096 = vpop.f32.mrb[0].mxu0
    %v1097 = vadd.f32 %v802, %v1096
    %v1098 = vpop.f32.mrb[0].mxu0
    %1099 = vmatprep.mubr.f32.mxu0 0.0
    %1100 = vmatmul.mubr.f32.gmra.mrb[0].mxu0 %v886
    %v1101 = vpop.f32.mrb[0].mxu0
    %v1102 = vadd.f32 %v802, %v1101
    %v1103 = vpop.f32.mrb[0].mxu0
    %1104 = vmatprep.mubr.f32.mxu0 0.0
    %1105 = vmatmul.mubr.f32.gmra.mrb[0].mxu0 %v889
    %v1106 = vpop.f32.mrb[0].mxu0
    %v1107 = vadd.f32 %v802, %v1106
    %v1108 = vpop.f32.mrb[0].mxu0
    %1109 = vmatprep.mubr.f32.mxu0 0.0
    %1110 = vmatmul.mubr.f32.gmra.mrb[0].mxu0 %v892
    %v1111 = vpop.f32.mrb[0].mxu0
    %v1112 = vadd.f32 %v802, %v1111
    %v1113 = vpop.f32.mrb[0].mxu0
    %1114 = vmatprep.mubr.f32.mxu0 0.0
    %1115 = vmatmul.mubr.f32.gmra.mrb[0].mxu0 %v895
    %v1116 = vpop.f32.mrb[0].mxu0
    %v1117 = vadd.f32 %v802, %v1116
    %v1118 = vpop.f32.mrb[0].mxu0
    %1119 = vmatprep.mubr.f32.mxu0 0.0
    %1120 = vmatmul.mubr.f32.gmra.mrb[0].mxu0 %v898
    %v1121 = vpop.f32.mrb[0].mxu0
    %v1122 = vadd.f32 %v802, %v1121
    %v1123 = vpop.f32.mrb[0].mxu0
    %1124 = vdwg.mxu0
    %1125 = vst [vmem:[#allocation2] sm:$0xff] %v967
    %1126 = vst [vmem:[#allocation2 + $0x8] sm:$0xff] %v972
    %1127 = vst [vmem:[#allocation2 + $0x10] sm:$0xff] %v977
    %1128 = vst [vmem:[#allocation2 + $0x18] sm:$0xff] %v982
    %1129 = vst [vmem:[#allocation2 + $0x20] sm:$0xff] %v987
    %1130 = vst [vmem:[#allocation2 + $0x28] sm:$0xff] %v992
    %1131 = vst [vmem:[#allocation2 + $0x30] sm:$0xff] %v997
    %1132 = vst [vmem:[#allocation2 + $0x38] sm:$0xff] %v1002
    %1133 = vst [vmem:[#allocation2 + $0x40] sm:$0xff] %v1007
    %1134 = vst [vmem:[#allocation2 + $0x48] sm:$0xff] %v1012
    %1135 = vst [vmem:[#allocation2 + $0x50] sm:$0xff] %v1017
    %1136 = vst [vmem:[#allocation2 + $0x58] sm:$0xff] %v1022
    %1137 = vst [vmem:[#allocation2 + $0x60] sm:$0xff] %v1027
    %1138 = vst [vmem:[#allocation2 + $0x68] sm:$0xff] %v1032
    %1139 = vst [vmem:[#allocation2 + $0x70] sm:$0xff] %v1037
    %1140 = vst [vmem:[#allocation2 + $0x78] sm:$0xff] %v1042
    %1141 = vst [vmem:[#allocation2 + $0x80] sm:$0xff] %v1047
    %1142 = vst [vmem:[#allocation2 + $0x88] sm:$0xff] %v1052
    %1143 = vst [vmem:[#allocation2 + $0x90] sm:$0xff] %v1057
    %1144 = vst [vmem:[#allocation2 + $0x98] sm:$0xff] %v1062
    %1145 = vst [vmem:[#allocation2 + $0xa0] sm:$0xff] %v1067
    %1146 = vst [vmem:[#allocation2 + $0xa8] sm:$0xff] %v1072
    %1147 = vst [vmem:[#allocation2 + $0xb0] sm:$0xff] %v1077
    %1148 = vst [vmem:[#allocation2 + $0xb8] sm:$0xff] %v1082
    %1149 = vst [vmem:[#allocation2 + $0xc0] sm:$0xff] %v1087
    %1150 = vst [vmem:[#allocation2 + $0xc8] sm:$0xff] %v1092
    %1151 = vst [vmem:[#allocation2 + $0xd0] sm:$0xff] %v1097
    %1152 = vst [vmem:[#allocation2 + $0xd8] sm:$0xff] %v1102
    %1153 = vst [vmem:[#allocation2 + $0xe0] sm:$0xff] %v1107
    %1154 = vst [vmem:[#allocation2 + $0xe8] sm:$0xff] %v1112
    %1155 = vst [vmem:[#allocation2 + $0xf0] sm:$0xff] %v1117
    %1156 = vst [vmem:[#allocation2 + $0xf8] sm:$0xff] %v1122
    // Predicated region
    $region30: #{tpu_custom_call.1} parent=1 // pred_check
      _
    $region31: #{tpu_custom_call.1} parent=1 // pred_check_branch
      %1158 = sbr.rel (0) target = $region33
    $region32: #{tpu_custom_call.1} parent=1 // pred_region
      %s1160 = ssub.s32 4096, 4096
      %1161 = vsyncadd [#allocation3], %s1160
      %s1162 = sshll.u32 [#allocation2], 4
      %s1163 = int_to_ptr.vmem [resolvable:$true] %s1162
      %1168 = dma.vmem_to_hbm [thread:$0]  %s1163, 4096, %s7, [#allocation3], 128, 128, 8
    $region33: #{tpu_custom_call.1} parent=1 // pred_fallthru
      _
    // Predicated region
    $region34: #{tpu_custom_call.1} parent=1 // pred_check
      _
    $region35: #{tpu_custom_call.1} parent=1 // pred_check_branch
      %1170 = sbr.rel (0) target = $region37
    $region36: #{tpu_custom_call.1} parent=1 // pred_region
      %1171 = dma.done [#allocation3], 4096
    $region37: #{tpu_custom_call.1} parent=1 // pred_fallthru
      _
    %1172 = vsyncpa [#allocation3], 1

</llo_original>
